<compile_context>
chip_gen: v5e
topology: v5e:2x2
jax: 0.10.0
libtpu: 0.0.40
codegen_flags: <defaults>
</compile_context>

<pallas_src>
import functools
import math

import jax
import jax.numpy as jnp
from jax import lax
from jax.experimental import pallas as pl

# Model hyperparameters (small, consistent with the module's constructor).
D_MODEL = 32
NHEAD = 4
HEAD_DIM = D_MODEL // NHEAD
DIM_FF = 64
SEQ = 8
BATCH = 2
EPS = 1e-5  # layer_norm_eps

# Static layout of the packed constants slab (rows x lanes); all row offsets 8-aligned so
# in-kernel slices never cross a (8,128) tile boundary at an unaligned sublane start.
N_ROWS = SEQ * BATCH                               # flattened token rows, row i = s*BATCH + b
HN = NHEAD * N_ROWS                                # wide "head-major key" axis
CONST_W = max(D_MODEL, DIM_FF, HN)                 # slab lane width (64)
_VEC_ROWS = 10                                     # bq,bk,bv,bo,ln1_g,ln1_b,ln2_g,ln2_b,b2,b1
HS_OFF = ((_VEC_ROWS + 7) // 8) * 8                # head_sel rows   [HS_OFF, HS_OFF+HN)
BB_OFF = HS_OFF + HN                               # batch-bias rows [BB_OFF, BB_OFF+N_ROWS)
CONST_ROWS = ((BB_OFF + N_ROWS + 7) // 8) * 8      # total slab rows (96)


def _layer_norm(x, gamma, beta):
    # x: (N, D); gamma/beta: (1, D). Biased variance, matching torch.nn.LayerNorm. f32 math.
    mean = jnp.mean(x, axis=-1, keepdims=True)
    centered = x - mean
    var = jnp.mean(centered * centered, axis=-1, keepdims=True)
    return centered * lax.rsqrt(var + EPS) * gamma + beta


def _gelu_tanh(x):
    # tanh-GELU: 0.5*x*(1+tanh(sqrt(2/pi)*(x+0.044715*x^3))); the tanh runs on the EUP slot.
    c0 = 0.7978845608028654  # sqrt(2/pi)
    c1 = 0.044715
    return 0.5 * x * (1.0 + jnp.tanh(c0 * (x + c1 * x * x * x)))


def encoder_layer_kernel(q_ref, k_ref, v_ref, w_ref, ffw_ref, consts_ref, o_ref, *, nhead):
    f32, bf16 = jnp.float32, jnp.bfloat16
    n_rows, d_model = q_ref.shape              # n_rows = S*B, row i = s*B + b
    dim_ff = ffw_ref.shape[1]
    hn = nhead * n_rows

    def mxu(a, b):                             # bf16 MXU operands, f32 accumulation
        return jnp.dot(a.astype(bf16), b.astype(bf16), preferred_element_type=f32)

    q = q_ref[...]                             # (N, D) original query stream (for residual)
    k = k_ref[...]
    v = v_ref[...]

    # ---- packed constants (static offsets; layout defined in pack_params) ----
    vecs = consts_ref[0:HS_OFF, :]             # (16, CONST_W) f32
    bq = vecs[0:1, 0:d_model]                  # pre-scaled by 1/sqrt(head_dim)
    bk = vecs[1:2, 0:d_model]
    bv = vecs[2:3, 0:d_model]
    bo = vecs[3:4, 0:d_model]
    ln1_g, ln1_b = vecs[4:5, 0:d_model], vecs[5:6, 0:d_model]
    ln2_g, ln2_b = vecs[6:7, 0:d_model], vecs[7:8, 0:d_model]
    b2 = vecs[8:9, 0:d_model]
    b1 = vecs[9:10, 0:dim_ff]
    head_sel = consts_ref[HS_OFF:BB_OFF, 0:d_model]            # (HN, D) 0/1 head indicator
    batch_bias = consts_ref[BB_OFF:BB_OFF + n_rows, 0:hn]      # (N, HN) 0 / -1e30 additive

    # ---- MultiheadAttention input projections (weights pre-transposed to (in,out)) ----
    qp = mxu(q, w_ref[0]) + bq                 # score scale folded into w_ref[0]/bq
    kp = mxu(k, w_ref[1]) + bk
    vp = mxu(v, w_ref[2]) + bv

    # ---- all heads via wide 2D matmuls against head-block-masked K/V slabs ----
    # Wide column c encodes (head h = c // n_rows, key row j = c % n_rows).
    k_big = jnp.tile(kp, (nhead, 1)) * head_sel                # (HN, D), zero outside own head
    v_big = jnp.tile(vp, (nhead, 1)) * head_sel
    s = lax.dot_general(qp.astype(bf16), k_big.astype(bf16),
                        (((1,), (1,)), ((), ())), preferred_element_type=f32)    # (N, HN)
    s = s + batch_bias                                         # same-batch masking

    # Softmax normalized AFTER the PV matmul: a row-global max is a valid stabilizer for
    # every head segment, and the per-(row, head) scale distributes over the V sum, so the
    # denominator is just e @ head_sel ((N,HN)x(HN,D)) — no (HN,HN) segment-sum GEMM.
    e = jnp.exp(s - jnp.max(s, axis=-1, keepdims=True))        # (N, HN) f32
    eb = e.astype(bf16)
    unnorm = jnp.dot(eb, v_big.astype(bf16), preferred_element_type=f32)         # (N, D)
    denom = jnp.dot(eb, head_sel.astype(bf16), preferred_element_type=f32)       # (N, D)
    attn = unnorm * pl.reciprocal(jnp.maximum(denom, 1e-30), approx=True)
    sa = mxu(attn, w_ref[3]) + bo                              # out_proj

    # ---- post-norm residual blocks (norm_first=False) ----
    x = _layer_norm(q + sa, ln1_g, ln1_b)
    w1_t = ffw_ref[0:d_model, :]                               # (D, F) bf16
    w2_t = ffw_ref[d_model:d_model + dim_ff, 0:d_model]        # (F, D) bf16
    h1 = _gelu_tanh(mxu(x, w1_t) + b1)
    ff = mxu(h1, w2_t) + b2
    # TODO(synk): dropout/dropout1/dropout2 are identity (eval mode); no RNG dropout here.
    o_ref[...] = _layer_norm(x + ff, ln2_g, ln2_b).astype(o_ref.dtype)


def pack_params(p):
    """One-time prep: pre-transpose/scale/cast weights to bf16, precompute the static
    head/batch masks, and pack every small vector + mask into one f32 consts slab."""
    f32, bf16 = jnp.float32, jnp.bfloat16
    scale = 1.0 / math.sqrt(HEAD_DIM)

    # Attention weights, (in, out) layout; score scale folded into W_q.
    w_sq = jnp.stack([p["wq"].T * scale, p["wk"].T, p["wv"].T, p["wo"].T],
                     axis=0).astype(bf16)                                   # (4, D, D)

    # FFN weights in one slab: rows [0,D) = W1^T (D,F); rows [D,D+F) lanes [0,D) = W2^T.
    ffw = jnp.zeros((D_MODEL + DIM_FF, DIM_FF), f32)
    ffw = ffw.at[0:D_MODEL, :].set(p["w1"].T)
    ffw = ffw.at[D_MODEL:D_MODEL + DIM_FF, 0:D_MODEL].set(p["w2"].T)
    ffw = ffw.astype(bf16)                                                  # (D+F, F)

    # Static masks hoisted out of the kernel (depend only on shapes).
    c_idx = jnp.arange(HN)[:, None]
    f_idx = jnp.arange(D_MODEL)[None, :]
    head_sel = ((c_idx // N_ROWS) == (f_idx // HEAD_DIM)).astype(f32)       # (HN, D)
    i_idx = jnp.arange(N_ROWS)[:, None]
    j_idx = jnp.arange(HN)[None, :] % N_ROWS
    batch_bias = jnp.where((i_idx % BATCH) == (j_idx % BATCH), 0.0, -1e30).astype(f32)

    consts = jnp.zeros((CONST_ROWS, CONST_W), f32)
    vec_rows = [p["bq"] * scale, p["bk"], p["bv"], p["bo"],
                p["ln1_g"], p["ln1_b"], p["ln2_g"], p["ln2_b"], p["b2"], p["b1"]]
    for r, vec in enumerate(vec_rows):
        consts = consts.at[r, 0:vec.shape[-1]].set(vec.reshape(-1))
    consts = consts.at[HS_OFF:HS_OFF + HN, 0:D_MODEL].set(head_sel)
    consts = consts.at[BB_OFF:BB_OFF + N_ROWS, 0:HN].set(batch_bias)

    return {"w_sq": w_sq, "ffw": ffw, "consts": consts}


def _full_spec(shape):
    nd = len(shape)
    return pl.BlockSpec(shape, lambda *_: (0,) * nd)


@jax.jit
def transformer_encoder_layer(q, k, v, packed):
    """q, k, v: (S, B, D) float32 (batch_first=False). Returns (out, None)."""
    s_len, b_sz, d_model = q.shape
    n_rows = s_len * b_sz
    # (S, B, D) -> (N, D) is a free row-major reshape (no wrapper-side stack / transpose);
    # batch separation is enforced inside the kernel by the precomputed batch-bias mask.
    args = (q.reshape(n_rows, d_model), k.reshape(n_rows, d_model),
            v.reshape(n_rows, d_model),
            packed["w_sq"], packed["ffw"], packed["consts"])

    out = pl.pallas_call(
        functools.partial(encoder_layer_kernel, nhead=NHEAD),
        out_shape=jax.ShapeDtypeStruct((n_rows, d_model), q.dtype),
        in_specs=[_full_spec(a.shape) for a in args],
        out_specs=_full_spec((n_rows, d_model)),
        # Gridless single invocation: working set <100 KB, purely latency/overhead bound on
        # every TPU generation.  TODO(synk): if this layer is one of a stack (or S*B grows),
        # fuse layers into one pallas_call and/or add a leading "parallel" grid axis
        # (dimension_semantics) so v7x's second TensorCore is not idle.
    )(*args)
    # need_weights=False in the reference forward -> attention weights output is None.
    return out.reshape(s_len, b_sz, d_model), None


def init_params(key):
    ks = jax.random.split(key, 16)
    w, b = 0.2, 0.1
    return {
        # MultiheadAttention in_proj split into q/k/v pieces (torch layout: (out, in)).
        "wq": w * jax.random.normal(ks[0], (D_MODEL, D_MODEL), jnp.float32),
        "wk": w * jax.random.normal(ks[1], (D_MODEL, D_MODEL), jnp.float32),
        "wv": w * jax.random.normal(ks[2], (D_MODEL, D_MODEL), jnp.float32),
        "bq": b * jax.random.normal(ks[3], (1, D_MODEL), jnp.float32),
        "bk": b * jax.random.normal(ks[4], (1, D_MODEL), jnp.float32),
        "bv": b * jax.random.normal(ks[5], (1, D_MODEL), jnp.float32),
        "wo": w * jax.random.normal(ks[6], (D_MODEL, D_MODEL), jnp.float32),
        "bo": b * jax.random.normal(ks[7], (1, D_MODEL), jnp.float32),
        "ln1_g": 1.0 + b * jax.random.normal(ks[8], (1, D_MODEL), jnp.float32),
        "ln1_b": b * jax.random.normal(ks[9], (1, D_MODEL), jnp.float32),
        "ln2_g": 1.0 + b * jax.random.normal(ks[10], (1, D_MODEL), jnp.float32),
        "ln2_b": b * jax.random.normal(ks[11], (1, D_MODEL), jnp.float32),
        "w1": w * jax.random.normal(ks[12], (DIM_FF, D_MODEL), jnp.float32),
        "b1": b * jax.random.normal(ks[13], (1, DIM_FF), jnp.float32),
        "w2": w * jax.random.normal(ks[14], (D_MODEL, DIM_FF), jnp.float32),
        "b2": b * jax.random.normal(ks[15], (1, D_MODEL), jnp.float32),
    }


def reference_forward(q, k, v, p):
    """Pure-JAX f32 reference of the PyTorch module forward (eval mode, exact erf GELU)."""
    s_len, b_sz, d = q.shape
    h, dh = NHEAD, d // NHEAD
    lin = lambda x, w, bias: jnp.einsum("sbd,ed->sbe", x, w) + bias[0]
    qp, kp, vp = lin(q, p["wq"], p["bq"]), lin(k, p["wk"], p["bk"]), lin(v, p["wv"], p["bv"])
    qh = qp.reshape(s_len, b_sz, h, dh)
    kh = kp.reshape(s_len, b_sz, h, dh)
    vh = vp.reshape(s_len, b_sz, h, dh)
    sc = jnp.einsum("qbhd,kbhd->bhqk", qh, kh) / math.sqrt(dh)
    a = jax.nn.softmax(sc, axis=-1)
    o = jnp.einsum("bhqk,kbhd->qbhd", a, vh).reshape(s_len, b_sz, d)
    sa = jnp.einsum("sbd,ed->sbe", o, p["wo"]) + p["bo"][0]

    def ln(x, g, bias):
        m = jnp.mean(x, axis=-1, keepdims=True)
        var = jnp.mean((x - m) ** 2, axis=-1, keepdims=True)
        return (x - m) / jnp.sqrt(var + EPS) * g[0] + bias[0]

    x = ln(q + sa, p["ln1_g"], p["ln1_b"])
    h1 = jax.nn.gelu(jnp.einsum("sbd,fd->sbf", x, p["w1"]) + p["b1"][0], approximate=False)
    ff = jnp.einsum("sbf,df->sbd", h1, p["w2"]) + p["b2"][0]
    return ln(x + ff, p["ln2_g"], p["ln2_b"])


if __name__ == "__main__":
    key = jax.random.PRNGKey(0)
    k_params, k_q, k_k, k_v = jax.random.split(key, 4)
    params = init_params(k_params)
    packed = pack_params(params)

    # batch_first=False: inputs are (seq, batch, d_model).
    q = jax.random.normal(k_q, (SEQ, BATCH, D_MODEL), jnp.float32)
    k = jax.random.normal(k_k, (SEQ, BATCH, D_MODEL), jnp.float32)
    v = jax.random.normal(k_v, (SEQ, BATCH, D_MODEL), jnp.float32)

    out, attn_weights = transformer_encoder_layer(q, k, v, packed)
    out = jax.block_until_ready(out)
    assert out.shape == (SEQ, BATCH, D_MODEL)
    assert attn_weights is None

    ref = reference_forward(q, k, v, params)
    max_err = float(jnp.max(jnp.abs(out - ref)))
    mean_err = float(jnp.mean(jnp.abs(out - ref)))
    # bf16 MXU operands (f32 accumulation) + tanh-GELU + approx-reciprocal softmax denom:
    # expected deviation from the exact-f32 reference is ~1e-2 max-abs / few e-3 mean-abs at
    # these output magnitudes (O(1-3) after LayerNorm); assert with margin.
    assert max_err < 5e-2, f"kernel/reference mismatch: max abs err = {max_err}"
    assert mean_err < 1e-2, f"kernel/reference mismatch: mean abs err = {mean_err}"
    print("KERNEL_OK")
</pallas_src>

<mosaic_0001>
module attributes {stable_mosaic.version = 11 : i64} {
  func.func @encoder_layer_kernel(%arg0: memref<16x32xf32, #tpu.memory_space<vmem>>, %arg1: memref<16x32xf32, #tpu.memory_space<vmem>>, %arg2: memref<16x32xf32, #tpu.memory_space<vmem>>, %arg3: memref<4x32x32xbf16, #tpu.memory_space<vmem>>, %arg4: memref<96x64xbf16, #tpu.memory_space<vmem>>, %arg5: memref<96x64xf32, #tpu.memory_space<vmem>>, %arg6: memref<16x32xf32, #tpu.memory_space<vmem>>) attributes {dimension_semantics = [], scalar_prefetch = 0 : i64, scratch_operands = 0 : i64, tpu.core_type = #tpu.core_type<tc>} {
    %c0 = arith.constant 0 : index
    %c0_0 = arith.constant 0 : index
    %0 = vector.load %arg0[%c0, %c0_0] : memref<16x32xf32, #tpu.memory_space<vmem>>, vector<16x32xf32>
    %c0_1 = arith.constant 0 : index
    %c0_2 = arith.constant 0 : index
    %1 = vector.load %arg1[%c0_1, %c0_2] : memref<16x32xf32, #tpu.memory_space<vmem>>, vector<16x32xf32>
    %c0_3 = arith.constant 0 : index
    %c0_4 = arith.constant 0 : index
    %2 = vector.load %arg2[%c0_3, %c0_4] : memref<16x32xf32, #tpu.memory_space<vmem>>, vector<16x32xf32>
    %c0_5 = arith.constant 0 : index
    %c0_6 = arith.constant 0 : index
    %3 = vector.load %arg5[%c0_5, %c0_6] : memref<96x64xf32, #tpu.memory_space<vmem>>, vector<16x64xf32>
    %4 = vector.extract_strided_slice %3 {offsets = [0, 0], sizes = [1, 32], strides = [1, 1]} : vector<16x64xf32> to vector<1x32xf32>
    %5 = vector.extract_strided_slice %3 {offsets = [1, 0], sizes = [1, 32], strides = [1, 1]} : vector<16x64xf32> to vector<1x32xf32>
    %6 = vector.extract_strided_slice %3 {offsets = [2, 0], sizes = [1, 32], strides = [1, 1]} : vector<16x64xf32> to vector<1x32xf32>
    %7 = vector.extract_strided_slice %3 {offsets = [3, 0], sizes = [1, 32], strides = [1, 1]} : vector<16x64xf32> to vector<1x32xf32>
    %8 = vector.extract_strided_slice %3 {offsets = [4, 0], sizes = [1, 32], strides = [1, 1]} : vector<16x64xf32> to vector<1x32xf32>
    %9 = vector.extract_strided_slice %3 {offsets = [5, 0], sizes = [1, 32], strides = [1, 1]} : vector<16x64xf32> to vector<1x32xf32>
    %10 = vector.extract_strided_slice %3 {offsets = [6, 0], sizes = [1, 32], strides = [1, 1]} : vector<16x64xf32> to vector<1x32xf32>
    %11 = vector.extract_strided_slice %3 {offsets = [7, 0], sizes = [1, 32], strides = [1, 1]} : vector<16x64xf32> to vector<1x32xf32>
    %12 = vector.extract_strided_slice %3 {offsets = [8, 0], sizes = [1, 32], strides = [1, 1]} : vector<16x64xf32> to vector<1x32xf32>
    %13 = vector.extract_strided_slice %3 {offsets = [9, 0], sizes = [1, 64], strides = [1, 1]} : vector<16x64xf32> to vector<1x64xf32>
    %c16 = arith.constant 16 : index
    %c0_7 = arith.constant 0 : index
    %14 = vector.load %arg5[%c16, %c0_7] : memref<96x64xf32, #tpu.memory_space<vmem>>, vector<64x32xf32>
    %c80 = arith.constant 80 : index
    %c0_8 = arith.constant 0 : index
    %15 = vector.load %arg5[%c80, %c0_8] : memref<96x64xf32, #tpu.memory_space<vmem>>, vector<16x64xf32>
    %c0_9 = arith.constant 0 : index
    %c0_10 = arith.constant 0 : index
    %c0_11 = arith.constant 0 : index
    %16 = vector.load %arg3[%c0_9, %c0_10, %c0_11] : memref<4x32x32xbf16, #tpu.memory_space<vmem>>, vector<1x32x32xbf16>
    %17 = vector.shape_cast %16 : vector<1x32x32xbf16> to vector<32x32xbf16>
    %18 = arith.truncf %0 : vector<16x32xf32> to vector<16x32xbf16>
    %cst = arith.constant dense<0.000000e+00> : vector<16x32xf32>
    %19 = tpu.matmul %18, %17, %cst {dimension_numbers = #tpu.dot_dimension_numbers<[1], [0], [0], [1], [0, 0, 1, 1], [], []>} : vector<16x32xbf16>, vector<32x32xbf16>, vector<16x32xf32> -> vector<16x32xf32>
    %20 = vector.broadcast %4 : vector<1x32xf32> to vector<16x32xf32>
    %21 = arith.addf %19, %20 : vector<16x32xf32>
    %c1 = arith.constant 1 : index
    %c0_12 = arith.constant 0 : index
    %c0_13 = arith.constant 0 : index
    %22 = vector.load %arg3[%c1, %c0_12, %c0_13] : memref<4x32x32xbf16, #tpu.memory_space<vmem>>, vector<1x32x32xbf16>
    %23 = vector.shape_cast %22 : vector<1x32x32xbf16> to vector<32x32xbf16>
    %24 = arith.truncf %1 : vector<16x32xf32> to vector<16x32xbf16>
    %cst_14 = arith.constant dense<0.000000e+00> : vector<16x32xf32>
    %25 = tpu.matmul %24, %23, %cst_14 {dimension_numbers = #tpu.dot_dimension_numbers<[1], [0], [0], [1], [0, 0, 1, 1], [], []>} : vector<16x32xbf16>, vector<32x32xbf16>, vector<16x32xf32> -> vector<16x32xf32>
    %26 = vector.broadcast %5 : vector<1x32xf32> to vector<16x32xf32>
    %27 = arith.addf %25, %26 : vector<16x32xf32>
    %c2 = arith.constant 2 : index
    %c0_15 = arith.constant 0 : index
    %c0_16 = arith.constant 0 : index
    %28 = vector.load %arg3[%c2, %c0_15, %c0_16] : memref<4x32x32xbf16, #tpu.memory_space<vmem>>, vector<1x32x32xbf16>
    %29 = vector.shape_cast %28 : vector<1x32x32xbf16> to vector<32x32xbf16>
    %30 = arith.truncf %2 : vector<16x32xf32> to vector<16x32xbf16>
    %cst_17 = arith.constant dense<0.000000e+00> : vector<16x32xf32>
    %31 = tpu.matmul %30, %29, %cst_17 {dimension_numbers = #tpu.dot_dimension_numbers<[1], [0], [0], [1], [0, 0, 1, 1], [], []>} : vector<16x32xbf16>, vector<32x32xbf16>, vector<16x32xf32> -> vector<16x32xf32>
    %32 = vector.broadcast %6 : vector<1x32xf32> to vector<16x32xf32>
    %33 = arith.addf %31, %32 : vector<16x32xf32>
    %34 = tpu.concatenate %27, %27, %27, %27 in 0 : vector<16x32xf32>, vector<16x32xf32>, vector<16x32xf32>, vector<16x32xf32> -> vector<64x32xf32>
    %35 = arith.mulf %34, %14 : vector<64x32xf32>
    %36 = tpu.concatenate %33, %33, %33, %33 in 0 : vector<16x32xf32>, vector<16x32xf32>, vector<16x32xf32>, vector<16x32xf32> -> vector<64x32xf32>
    %37 = arith.mulf %36, %14 : vector<64x32xf32>
    %38 = arith.truncf %21 : vector<16x32xf32> to vector<16x32xbf16>
    %39 = arith.truncf %35 : vector<64x32xf32> to vector<64x32xbf16>
    %cst_18 = arith.constant dense<0.000000e+00> : vector<16x64xf32>
    %40 = tpu.matmul %38, %39, %cst_18 {dimension_numbers = #tpu.dot_dimension_numbers<[1], [1], [0], [0], [0, 0, 1, 0], [], []>} : vector<16x32xbf16>, vector<64x32xbf16>, vector<16x64xf32> -> vector<16x64xf32>
    %41 = arith.addf %40, %15 : vector<16x64xf32>
    %cst_19 = arith.constant dense<0xFF800000> : vector<16xf32>
    %42 = vector.multi_reduction <maximumf>, %41, %cst_19 [1] : vector<16x64xf32> to vector<16xf32>
    %43 = vector.shape_cast %42 : vector<16xf32> to vector<16x1xf32>
    %44 = vector.broadcast %43 : vector<16x1xf32> to vector<16x64xf32>
    %45 = arith.subf %41, %44 : vector<16x64xf32>
    %46 = math.exp %45 : vector<16x64xf32>
    %47 = arith.truncf %46 : vector<16x64xf32> to vector<16x64xbf16>
    %48 = arith.truncf %37 : vector<64x32xf32> to vector<64x32xbf16>
    %cst_20 = arith.constant dense<0.000000e+00> : vector<16x32xf32>
    %49 = tpu.matmul %47, %48, %cst_20 {dimension_numbers = #tpu.dot_dimension_numbers<[1], [0], [0], [1], [0, 0, 1, 1], [], []>} : vector<16x64xbf16>, vector<64x32xbf16>, vector<16x32xf32> -> vector<16x32xf32>
    %50 = arith.truncf %14 : vector<64x32xf32> to vector<64x32xbf16>
    %cst_21 = arith.constant dense<0.000000e+00> : vector<16x32xf32>
    %51 = tpu.matmul %47, %50, %cst_21 {dimension_numbers = #tpu.dot_dimension_numbers<[1], [0], [0], [1], [0, 0, 1, 1], [], []>} : vector<16x64xbf16>, vector<64x32xbf16>, vector<16x32xf32> -> vector<16x32xf32>
    %cst_22 = arith.constant 1.000000e-30 : f32
    %52 = vector.broadcast %cst_22 : f32 to vector<16x32xf32>
    %53 = arith.maximumf %51, %52 : vector<16x32xf32>
    %54 = tpu.reciprocal %53 {approx = true} : vector<16x32xf32> -> vector<16x32xf32>
    %55 = arith.mulf %49, %54 : vector<16x32xf32>
    %c3 = arith.constant 3 : index
    %c0_23 = arith.constant 0 : index
    %c0_24 = arith.constant 0 : index
    %56 = vector.load %arg3[%c3, %c0_23, %c0_24] : memref<4x32x32xbf16, #tpu.memory_space<vmem>>, vector<1x32x32xbf16>
    %57 = vector.shape_cast %56 : vector<1x32x32xbf16> to vector<32x32xbf16>
    %58 = arith.truncf %55 : vector<16x32xf32> to vector<16x32xbf16>
    %cst_25 = arith.constant dense<0.000000e+00> : vector<16x32xf32>
    %59 = tpu.matmul %58, %57, %cst_25 {dimension_numbers = #tpu.dot_dimension_numbers<[1], [0], [0], [1], [0, 0, 1, 1], [], []>} : vector<16x32xbf16>, vector<32x32xbf16>, vector<16x32xf32> -> vector<16x32xf32>
    %60 = vector.broadcast %7 : vector<1x32xf32> to vector<16x32xf32>
    %61 = arith.addf %59, %60 : vector<16x32xf32>
    %62 = arith.addf %0, %61 : vector<16x32xf32>
    %cst_26 = arith.constant dense<0.000000e+00> : vector<16xf32>
    %63 = vector.multi_reduction <add>, %62, %cst_26 [1] : vector<16x32xf32> to vector<16xf32>
    %64 = vector.shape_cast %63 : vector<16xf32> to vector<16x1xf32>
    %cst_27 = arith.constant 3.200000e+01 : f32
    %65 = vector.broadcast %cst_27 : f32 to vector<16x1xf32>
    %66 = arith.divf %64, %65 : vector<16x1xf32>
    %67 = vector.broadcast %66 : vector<16x1xf32> to vector<16x32xf32>
    %68 = arith.subf %62, %67 : vector<16x32xf32>
    %69 = arith.mulf %68, %68 : vector<16x32xf32>
    %cst_28 = arith.constant dense<0.000000e+00> : vector<16xf32>
    %70 = vector.multi_reduction <add>, %69, %cst_28 [1] : vector<16x32xf32> to vector<16xf32>
    %71 = vector.shape_cast %70 : vector<16xf32> to vector<16x1xf32>
    %cst_29 = arith.constant 3.200000e+01 : f32
    %72 = vector.broadcast %cst_29 : f32 to vector<16x1xf32>
    %73 = arith.divf %71, %72 : vector<16x1xf32>
    %cst_30 = arith.constant 9.99999974E-6 : f32
    %74 = vector.broadcast %cst_30 : f32 to vector<16x1xf32>
    %75 = arith.addf %73, %74 : vector<16x1xf32>
    %76 = math.rsqrt %75 : vector<16x1xf32>
    %77 = vector.broadcast %76 : vector<16x1xf32> to vector<16x32xf32>
    %78 = arith.mulf %68, %77 : vector<16x32xf32>
    %79 = vector.broadcast %8 : vector<1x32xf32> to vector<16x32xf32>
    %80 = arith.mulf %78, %79 : vector<16x32xf32>
    %81 = vector.broadcast %9 : vector<1x32xf32> to vector<16x32xf32>
    %82 = arith.addf %80, %81 : vector<16x32xf32>
    %c0_31 = arith.constant 0 : index
    %c0_32 = arith.constant 0 : index
    %83 = vector.load %arg4[%c0_31, %c0_32] : memref<96x64xbf16, #tpu.memory_space<vmem>>, vector<32x64xbf16>
    %c32 = arith.constant 32 : index
    %c0_33 = arith.constant 0 : index
    %84 = vector.load %arg4[%c32, %c0_33] : memref<96x64xbf16, #tpu.memory_space<vmem>>, vector<64x32xbf16>
    %85 = arith.truncf %82 : vector<16x32xf32> to vector<16x32xbf16>
    %cst_34 = arith.constant dense<0.000000e+00> : vector<16x64xf32>
    %86 = tpu.matmul %85, %83, %cst_34 {dimension_numbers = #tpu.dot_dimension_numbers<[1], [0], [0], [1], [0, 0, 1, 1], [], []>} : vector<16x32xbf16>, vector<32x64xbf16>, vector<16x64xf32> -> vector<16x64xf32>
    %87 = vector.broadcast %13 : vector<1x64xf32> to vector<16x64xf32>
    %88 = arith.addf %86, %87 : vector<16x64xf32>
    %cst_35 = arith.constant 5.000000e-01 : f32
    %89 = vector.broadcast %cst_35 : f32 to vector<16x64xf32>
    %90 = arith.mulf %89, %88 : vector<16x64xf32>
    %cst_36 = arith.constant 4.471500e-02 : f32
    %91 = vector.broadcast %cst_36 : f32 to vector<16x64xf32>
    %92 = arith.mulf %91, %88 : vector<16x64xf32>
    %93 = arith.mulf %92, %88 : vector<16x64xf32>
    %94 = arith.mulf %93, %88 : vector<16x64xf32>
    %95 = arith.addf %88, %94 : vector<16x64xf32>
    %cst_37 = arith.constant 0.797884583 : f32
    %96 = vector.broadcast %cst_37 : f32 to vector<16x64xf32>
    %97 = arith.mulf %96, %95 : vector<16x64xf32>
    %98 = math.tanh %97 : vector<16x64xf32>
    %cst_38 = arith.constant 1.000000e+00 : f32
    %99 = vector.broadcast %cst_38 : f32 to vector<16x64xf32>
    %100 = arith.addf %99, %98 : vector<16x64xf32>
    %101 = arith.mulf %90, %100 : vector<16x64xf32>
    %102 = arith.truncf %101 : vector<16x64xf32> to vector<16x64xbf16>
    %cst_39 = arith.constant dense<0.000000e+00> : vector<16x32xf32>
    %103 = tpu.matmul %102, %84, %cst_39 {dimension_numbers = #tpu.dot_dimension_numbers<[1], [0], [0], [1], [0, 0, 1, 1], [], []>} : vector<16x64xbf16>, vector<64x32xbf16>, vector<16x32xf32> -> vector<16x32xf32>
    %104 = vector.broadcast %12 : vector<1x32xf32> to vector<16x32xf32>
    %105 = arith.addf %103, %104 : vector<16x32xf32>
    %106 = arith.addf %82, %105 : vector<16x32xf32>
    %cst_40 = arith.constant dense<0.000000e+00> : vector<16xf32>
    %107 = vector.multi_reduction <add>, %106, %cst_40 [1] : vector<16x32xf32> to vector<16xf32>
    %108 = vector.shape_cast %107 : vector<16xf32> to vector<16x1xf32>
    %cst_41 = arith.constant 3.200000e+01 : f32
    %109 = vector.broadcast %cst_41 : f32 to vector<16x1xf32>
    %110 = arith.divf %108, %109 : vector<16x1xf32>
    %111 = vector.broadcast %110 : vector<16x1xf32> to vector<16x32xf32>
    %112 = arith.subf %106, %111 : vector<16x32xf32>
    %113 = arith.mulf %112, %112 : vector<16x32xf32>
    %cst_42 = arith.constant dense<0.000000e+00> : vector<16xf32>
    %114 = vector.multi_reduction <add>, %113, %cst_42 [1] : vector<16x32xf32> to vector<16xf32>
    %115 = vector.shape_cast %114 : vector<16xf32> to vector<16x1xf32>
    %cst_43 = arith.constant 3.200000e+01 : f32
    %116 = vector.broadcast %cst_43 : f32 to vector<16x1xf32>
    %117 = arith.divf %115, %116 : vector<16x1xf32>
    %cst_44 = arith.constant 9.99999974E-6 : f32
    %118 = vector.broadcast %cst_44 : f32 to vector<16x1xf32>
    %119 = arith.addf %117, %118 : vector<16x1xf32>
    %120 = math.rsqrt %119 : vector<16x1xf32>
    %121 = vector.broadcast %120 : vector<16x1xf32> to vector<16x32xf32>
    %122 = arith.mulf %112, %121 : vector<16x32xf32>
    %123 = vector.broadcast %10 : vector<1x32xf32> to vector<16x32xf32>
    %124 = arith.mulf %122, %123 : vector<16x32xf32>
    %125 = vector.broadcast %11 : vector<1x32xf32> to vector<16x32xf32>
    %126 = arith.addf %124, %125 : vector<16x32xf32>
    %c0_45 = arith.constant 0 : index
    %c0_46 = arith.constant 0 : index
    %127 = vector.load %arg6[%c0_45, %c0_46] : memref<16x32xf32, #tpu.memory_space<vmem>>, vector<16x32xf32>
    tpu.vector_store %arg6[%c0_45, %c0_46], %126 {strides = array<i32>} : memref<16x32xf32, #tpu.memory_space<vmem>>, vector<16x32xf32>,
    return
  }
}

</mosaic_0001>

<llo_original>
// kernel: transformer_encoder_layer.1
$region0: #{transformer_encoder_layer.1}
  #allocation0 [shape = 'u32[]', space=smem, size = 0x4, offset = 0x4, fixed_abs, tag = 'smem constant byte address 0x4 - core index']
  #allocation1 [shape = 'u32[72,128]{1,0:T(1,128)}', space=vmem, size = 0x9000, scoped, tag = 'internal scratch']
  %s0 = inlined_call_operand.vmem [shape: f32[16,32], index: 0, kind: input, shape index: {}]
  %s1 = inlined_call_operand.vmem [shape: f32[16,32], index: 1, kind: input, shape index: {}]
  %s2 = inlined_call_operand.vmem [shape: f32[16,32], index: 2, kind: input, shape index: {}]
  %s3 = inlined_call_operand.vmem [shape: bf16[4,32,32], index: 3, kind: input, shape index: {}]
  %s4 = inlined_call_operand.vmem [shape: bf16[96,64], index: 4, kind: input, shape index: {}]
  %s5 = inlined_call_operand.vmem [shape: f32[96,64], index: 5, kind: input, shape index: {}]
  %s6 = inlined_call_operand.hbm [shape: f32[16,32], index: 6, kind: output, shape index: {}]
  %s7 = sld [smem:[#allocation0]]
  $region34: #{transformer_encoder_layer.1} parent=0
    _
  %s9 = ssub.s32 1, %s7
  %s10 = scalar_select 0, %s9, %s7
  $region1: #{transformer_encoder_layer.1} parent=0
    #allocation2 [shape = 'u8[8192]{0}', space=vmem, size = 0x2000, scoped, tag = 'output window, operand 0, single buffered']
    #allocation3 [shape = 's32[1]{0}', space=sflag, size = 0x4, scoped, tag = 'scoped memory for transformer_encoder_layer.1']
    %11 = vsyncpa [#allocation3], 0
    // Predicated region
    $region2: #{transformer_encoder_layer.1} parent=1 // pred_check
      _
    $region3: #{transformer_encoder_layer.1} parent=1 // pred_check_branch
      %13 = sbr.rel (0) target = $region5
    $region4: #{transformer_encoder_layer.1} parent=1 // pred_region
      _
    $region5: #{transformer_encoder_layer.1} parent=1 // pred_fallthru
      _
    // Predicated region
    $region6: #{transformer_encoder_layer.1} parent=1 // pred_check
      _
    $region7: #{transformer_encoder_layer.1} parent=1 // pred_check_branch
      %15 = sbr.rel (0) target = $region9
    $region8: #{transformer_encoder_layer.1} parent=1 // pred_region
      _
    $region9: #{transformer_encoder_layer.1} parent=1 // pred_fallthru
      _
    // Predicated region
    $region10: #{transformer_encoder_layer.1} parent=1 // pred_check
      _
    $region11: #{transformer_encoder_layer.1} parent=1 // pred_check_branch
      %17 = sbr.rel (0) target = $region13
    $region12: #{transformer_encoder_layer.1} parent=1 // pred_region
      _
    $region13: #{transformer_encoder_layer.1} parent=1 // pred_fallthru
      _
    // Predicated region
    $region14: #{transformer_encoder_layer.1} parent=1 // pred_check
      _
    $region15: #{transformer_encoder_layer.1} parent=1 // pred_check_branch
      %19 = sbr.rel (0) target = $region17
    $region16: #{transformer_encoder_layer.1} parent=1 // pred_region
      _
    $region17: #{transformer_encoder_layer.1} parent=1 // pred_fallthru
      _
    // Predicated region
    $region18: #{transformer_encoder_layer.1} parent=1 // pred_check
      _
    $region19: #{transformer_encoder_layer.1} parent=1 // pred_check_branch
      %21 = sbr.rel (0) target = $region21
    $region20: #{transformer_encoder_layer.1} parent=1 // pred_region
      _
    $region21: #{transformer_encoder_layer.1} parent=1 // pred_fallthru
      _
    // Predicated region
    $region22: #{transformer_encoder_layer.1} parent=1 // pred_check
      _
    $region23: #{transformer_encoder_layer.1} parent=1 // pred_check_branch
      %23 = sbr.rel (0) target = $region25
    $region24: #{transformer_encoder_layer.1} parent=1 // pred_region
      _
    $region25: #{transformer_encoder_layer.1} parent=1 // pred_fallthru
      _
    %v25 = vld [vmem:[%s0] sm:$0xff]
    %v26 = vld [vmem:[%s0 + $0x8] sm:$0xff]
    %v27 = vld [vmem:[%s1] sm:$0xff]
    %v28 = vld [vmem:[%s1 + $0x8] sm:$0xff]
    %v29 = vld [vmem:[%s2] sm:$0xff]
    %v30 = vld [vmem:[%s2 + $0x8] sm:$0xff]
    %v31 = vld [vmem:[%s5] sm:$0xff]
    %v32 = vld [vmem:[%s5 + $0x8] sm:$0xff]
    %v33 = vld [vmem:[%s5 + $0x10] sm:$0xff]
    %v34 = vld [vmem:[%s5 + $0x18] sm:$0xff]
    %v35 = vld [vmem:[%s5 + $0x20] sm:$0xff]
    %v36 = vld [vmem:[%s5 + $0x28] sm:$0xff]
    %v37 = vld [vmem:[%s5 + $0x30] sm:$0xff]
    %v38 = vld [vmem:[%s5 + $0x38] sm:$0xff]
    %v39 = vld [vmem:[%s5 + $0x40] sm:$0xff]
    %v40 = vld [vmem:[%s5 + $0x48] sm:$0xff]
    %v41 = vld [vmem:[%s5 + $0x50] sm:$0xff]
    %v42 = vld [vmem:[%s5 + $0x58] sm:$0xff]
    %v43 = vld [vmem:[%s3] sm:$0xf]
    %v44 = vld [vmem:[%s3 + $0x4] sm:$0xf]
    %v45 = vld [vmem:[%s3 + $0x8] sm:$0xf]
    %v46 = vld [vmem:[%s3 + $0xc] sm:$0xf]
    %v47 = vpack.c.bf16 %v26, %v25
    %v48 = vperm.slane %v31, 0
    %v53 = vunpack.c.l.b16 %v43
    %v54 = vunpack.c.l.b16 %v44
    %v55 = vunpack.c.l.b16 %v45
    %v56 = vunpack.c.l.b16 %v46
    %v57 = vpack.c.b16 %v54, %v53
    %v58 = vpack.c.b16 %v56, %v55
    %vm61 = vcmask 261120
    %v63 = vsel %vm61, %v47, 0
    %65 = vmatpush.bf16.msra.mxu0 0
    %66 = vmatpush.bf16.msra.mxu0 0
    %67 = vmatpush.bf16.msra.mxu0 0
    %68 = vmatpush.bf16.msra.mxu0 0
    %69 = vmatpush.bf16.msra.mxu0 0
    %70 = vmatpush.bf16.msra.mxu0 0
    %71 = vmatpush.bf16.msra.mxu0 %v58
    %72 = vmatpush.bf16.msra.mxu0 %v57
    %73 = vmatmul.bf16.gmra.mxu0 %v63
    %v74 = vpop.f32.mrf.mxu0
    %v75 = vadd.f32 %v48, %v74
    %v76 = vpop.f32.mrf.mxu0
    %v77 = vadd.f32 %v48, %v76
    %78 = vdwg.mxu0
    %s79 = scalar_lea.vmem %s3, 16
    %v80 = vld [vmem:[%s79] sm:$0xf]
    %v81 = vld [vmem:[%s79 + $0x4] sm:$0xf]
    %v82 = vld [vmem:[%s79 + $0x8] sm:$0xf]
    %v83 = vld [vmem:[%s79 + $0xc] sm:$0xf]
    %v84 = vpack.c.bf16 %v28, %v27
    %v85 = vperm.slane %v31, 1
    %v90 = vunpack.c.l.b16 %v80
    %v91 = vunpack.c.l.b16 %v81
    %v92 = vunpack.c.l.b16 %v82
    %v93 = vunpack.c.l.b16 %v83
    %v94 = vpack.c.b16 %v91, %v90
    %v95 = vpack.c.b16 %v93, %v92
    %v99 = vsel %vm61, %v84, 0
    %101 = vmatpush.bf16.msra.mxu0 0
    %102 = vmatpush.bf16.msra.mxu0 0
    %103 = vmatpush.bf16.msra.mxu0 0
    %104 = vmatpush.bf16.msra.mxu0 0
    %105 = vmatpush.bf16.msra.mxu0 0
    %106 = vmatpush.bf16.msra.mxu0 0
    %107 = vmatpush.bf16.msra.mxu0 %v95
    %108 = vmatpush.bf16.msra.mxu0 %v94
    %109 = vmatmul.bf16.gmra.mxu0 %v99
    %v110 = vpop.f32.mrf.mxu0
    %v111 = vadd.f32 %v85, %v110
    %v112 = vpop.f32.mrf.mxu0
    %v113 = vadd.f32 %v85, %v112
    %114 = vdwg.mxu0
    %s115 = scalar_lea.vmem %s3, 32
    %v116 = vld [vmem:[%s115] sm:$0xf]
    %v117 = vld [vmem:[%s115 + $0x4] sm:$0xf]
    %v118 = vld [vmem:[%s115 + $0x8] sm:$0xf]
    %v119 = vld [vmem:[%s115 + $0xc] sm:$0xf]
    %v120 = vpack.c.bf16 %v30, %v29
    %v121 = vperm.slane %v31, 2
    %v126 = vunpack.c.l.b16 %v116
    %v127 = vunpack.c.l.b16 %v117
    %v128 = vunpack.c.l.b16 %v118
    %v129 = vunpack.c.l.b16 %v119
    %v130 = vpack.c.b16 %v127, %v126
    %v131 = vpack.c.b16 %v129, %v128
    %v135 = vsel %vm61, %v120, 0
    %137 = vmatpush.bf16.msra.mxu0 0
    %138 = vmatpush.bf16.msra.mxu0 0
    %139 = vmatpush.bf16.msra.mxu0 0
    %140 = vmatpush.bf16.msra.mxu0 0
    %141 = vmatpush.bf16.msra.mxu0 0
    %142 = vmatpush.bf16.msra.mxu0 0
    %143 = vmatpush.bf16.msra.mxu0 %v131
    %144 = vmatpush.bf16.msra.mxu0 %v130
    %145 = vmatmul.bf16.gmra.mxu0 %v135
    %v146 = vpop.f32.mrf.mxu0
    %v147 = vadd.f32 %v121, %v146
    %v148 = vpop.f32.mrf.mxu0
    %v149 = vadd.f32 %v121, %v148
    %150 = vdwg.mxu0
    %v151 = vmul.f32 %v111, %v33
    %v152 = vmul.f32 %v113, %v34
    %v153 = vmul.f32 %v111, %v35
    %v154 = vmul.f32 %v113, %v36
    %v155 = vmul.f32 %v111, %v37
    %v156 = vmul.f32 %v113, %v38
    %v157 = vmul.f32 %v111, %v39
    %v158 = vmul.f32 %v113, %v40
    %v159 = vmul.f32 %v147, %v33
    %v160 = vmul.f32 %v149, %v34
    %v161 = vmul.f32 %v147, %v35
    %v162 = vmul.f32 %v149, %v36
    %v163 = vmul.f32 %v147, %v37
    %v164 = vmul.f32 %v149, %v38
    %v165 = vmul.f32 %v147, %v39
    %v166 = vmul.f32 %v149, %v40
    %v167 = vpack.c.bf16 %v77, %v75
    %v168 = vpack.c.bf16 %v152, %v151
    %v169 = vpack.c.bf16 %v154, %v153
    %v170 = vpack.c.bf16 %v156, %v155
    %v171 = vpack.c.bf16 %v158, %v157
    %v173 = vsel %vm61, %v167, 0
    %v176 = vsel %vm61, %v168, 0
    %v179 = vsel %vm61, %v169, 0
    %v182 = vsel %vm61, %v170, 0
    %v185 = vsel %vm61, %v171, 0
    %187 = vmatpush.bf16.xpose.msra.mxu0 0
    %188 = vmatpush.bf16.xpose.msra.mxu0 0
    %189 = vmatpush.bf16.xpose.msra.mxu0 0
    %190 = vmatpush.bf16.xpose.msra.mxu0 0
    %191 = vmatpush.bf16.xpose.msra.mxu0 %v185
    %192 = vmatpush.bf16.xpose.msra.mxu0 %v182
    %193 = vmatpush.bf16.xpose.msra.mxu0 %v179
    %194 = vmatpush.bf16.xpose.msra.mxu0 %v176
    %195 = vmatmul.bf16.gmra.mxu0 %v173
    %v196 = vpop.f32.mrf.mxu0
    %v197 = vadd.f32 %v41, %v196
    %v198 = vpop.f32.mrf.mxu0
    %v199 = vadd.f32 %v42, %v198
    %200 = vdwg.mxu0
    %vm201 = vcmask 523264
    %v202 = vsel %vm201, %v197, -inf
    %203 = vmax.xlane.f32.xlu0 %v202
    %v204 = vpop.xlane.xlu0 %203
    %v205 = vsel %vm201, %v199, -inf
    %206 = vmax.xlane.f32.xlu0 %v205
    %v207 = vpop.xlane.xlu0 %206
    %v208 = vsub.f32 %v197, %v204
    %v209 = vsub.f32 %v199, %v207
    %v210 = vmul.f32 %v208, 1.442695
    %v211 = vpow.pop %v210
    %v212 = vmul.f32 %v209, 1.442695
    %v213 = vpow.pop %v212
    %v214 = vpack.c.bf16 %v213, %v211
    %v215 = vpack.c.bf16 %v160, %v159
    %v216 = vpack.c.bf16 %v162, %v161
    %v217 = vpack.c.bf16 %v164, %v163
    %v218 = vpack.c.bf16 %v166, %v165
    %v220 = vsel %vm201, %v214, 0
    %222 = vmatpush.bf16.msra.mxu0 0
    %223 = vmatpush.bf16.msra.mxu0 0
    %224 = vmatpush.bf16.msra.mxu0 0
    %225 = vmatpush.bf16.msra.mxu0 0
    %226 = vmatpush.bf16.msra.mxu0 %v218
    %227 = vmatpush.bf16.msra.mxu0 %v217
    %228 = vmatpush.bf16.msra.mxu0 %v216
    %229 = vmatpush.bf16.msra.mxu0 %v215
    %230 = vmatmul.bf16.gmra.mxu0 %v220
    %v231 = vpop.f32.mrf.mxu0
    %v232 = vadd.f32 0.0, %v231
    %v233 = vpop.f32.mrf.mxu0
    %v234 = vadd.f32 0.0, %v233
    %235 = vdwg.mxu0
    %v236 = vpack.c.bf16 %v34, %v33
    %v237 = vpack.c.bf16 %v36, %v35
    %v238 = vpack.c.bf16 %v38, %v37
    %v239 = vpack.c.bf16 %v40, %v39
    %240 = vmatpush.bf16.msra.mxu0 0
    %241 = vmatpush.bf16.msra.mxu0 0
    %242 = vmatpush.bf16.msra.mxu0 0
    %243 = vmatpush.bf16.msra.mxu0 0
    %244 = vmatpush.bf16.msra.mxu0 %v239
    %245 = vmatpush.bf16.msra.mxu0 %v238
    %246 = vmatpush.bf16.msra.mxu0 %v237
    %247 = vmatpush.bf16.msra.mxu0 %v236
    %248 = vmatmul.bf16.gmra.mxu0 %v220
    %v249 = vpop.f32.mrf.mxu0
    %v250 = vadd.f32 0.0, %v249
    %v251 = vpop.f32.mrf.mxu0
    %v252 = vadd.f32 0.0, %v251
    %253 = vdwg.mxu0
    %v254 = vmax.f32 %v250, 1e-30
    %v255 = vmax.f32 %v252, 1e-30
    %v256 = vrcp.pop %v254
    %v257 = vrcp.pop %v255
    %v258 = vmul.f32 %v232, %v256
    %v259 = vmul.f32 %v234, %v257
    %s260 = scalar_lea.vmem %s3, 48
    %v261 = vld [vmem:[%s260] sm:$0xf]
    %v262 = vld [vmem:[%s260 + $0x4] sm:$0xf]
    %v263 = vld [vmem:[%s260 + $0x8] sm:$0xf]
    %v264 = vld [vmem:[%s260 + $0xc] sm:$0xf]
    %v265 = vpack.c.bf16 %v259, %v258
    %v266 = vperm.slane %v31, 3
    %v271 = vunpack.c.l.b16 %v261
    %v272 = vunpack.c.l.b16 %v262
    %v273 = vunpack.c.l.b16 %v263
    %v274 = vunpack.c.l.b16 %v264
    %v275 = vpack.c.b16 %v272, %v271
    %v276 = vpack.c.b16 %v274, %v273
    %v280 = vsel %vm61, %v265, 0
    %282 = vmatpush.bf16.msra.mxu0 0
    %283 = vmatpush.bf16.msra.mxu0 0
    %284 = vmatpush.bf16.msra.mxu0 0
    %285 = vmatpush.bf16.msra.mxu0 0
    %286 = vmatpush.bf16.msra.mxu0 0
    %287 = vmatpush.bf16.msra.mxu0 0
    %288 = vmatpush.bf16.msra.mxu0 %v276
    %289 = vmatpush.bf16.msra.mxu0 %v275
    %290 = vmatmul.bf16.gmra.mxu0 %v280
    %v291 = vpop.f32.mrf.mxu0
    %v292 = vadd.f32 %v266, %v291
    %v293 = vpop.f32.mrf.mxu0
    %v294 = vadd.f32 %v266, %v293
    %295 = vdwg.mxu0
    %v296 = vadd.f32 %v25, %v292
    %v297 = vadd.f32 %v26, %v294
    %v298 = vsel %vm61, %v296, 0.0
    %299 = vadd.xlane.f32.xlu0 %v298
    %v300 = vpop.xlane.xlu0 %299
    %v301 = vsel %vm61, %v297, 0.0
    %302 = vadd.xlane.f32.xlu0 %v301
    %v303 = vpop.xlane.xlu0 %302
    %v304 = vrcp.pop 32.0
    %v305 = vmul.f32 32.0, %v304
    %v306 = vsub.f32 1.0, %v305
    %v307 = vmul.f32 %v304, %v306
    %v308 = vadd.f32 %v304, %v307
    %vm309 = vweird.f32 %v304
    %v310 = vsel %vm309, %v304, %v308
    %v311 = vmul.f32 %v300, %v310
    %v312 = vmul.f32 %v303, %v310
    %v313 = vsub.f32 %v296, %v311
    %v314 = vsub.f32 %v297, %v312
    %v315 = vmul.f32 %v313, %v313
    %v316 = vmul.f32 %v314, %v314
    %v317 = vsel %vm61, %v315, 0.0
    %318 = vadd.xlane.f32.xlu0 %v317
    %v319 = vpop.xlane.xlu0 %318
    %v320 = vsel %vm61, %v316, 0.0
    %321 = vadd.xlane.f32.xlu0 %v320
    %v322 = vpop.xlane.xlu0 %321
    %v323 = vmul.f32 %v319, %v310
    %v324 = vmul.f32 %v322, %v310
    %v325 = vadd.f32 %v323, 1e-05
    %v326 = vadd.f32 %v324, 1e-05
    %v327 = vrsqrt.pop %v325
    %v328 = vmul.f32 %v327, %v325
    %v329 = vmul.f32 %v328, %v327
    %v330 = vmul.f32 0.5, %v329
    %v331 = vsub.f32 1.5, %v330
    %v332 = vmul.f32 %v327, %v331
    %vm333 = vweird.f32 %v325
    %vm334 = vweird.f32 %v327
    %vm335 = vmor %vm333, %vm334
    %v336 = vsel %vm335, %v327, %v332
    %v337 = vrsqrt.pop %v326
    %v338 = vmul.f32 %v337, %v326
    %v339 = vmul.f32 %v338, %v337
    %v340 = vmul.f32 0.5, %v339
    %v341 = vsub.f32 1.5, %v340
    %v342 = vmul.f32 %v337, %v341
    %vm343 = vweird.f32 %v326
    %vm344 = vweird.f32 %v337
    %vm345 = vmor %vm343, %vm344
    %v346 = vsel %vm345, %v337, %v342
    %v347 = vmul.f32 %v313, %v336
    %v348 = vmul.f32 %v314, %v346
    %v349 = vperm.slane %v31, 4
    %v350 = vmul.f32 %v347, %v349
    %v351 = vmul.f32 %v348, %v349
    %v352 = vperm.slane %v31, 5
    %v353 = vadd.f32 %v350, %v352
    %v354 = vadd.f32 %v351, %v352
    %v355 = vld [vmem:[%s4] sm:$0xf]
    %v356 = vld [vmem:[%s4 + $0x4] sm:$0xf]
    %v357 = vld [vmem:[%s4 + $0x8] sm:$0xf]
    %v358 = vld [vmem:[%s4 + $0xc] sm:$0xf]
    %v359 = vld [vmem:[%s4 + $0x10] sm:$0xf]
    %v360 = vld [vmem:[%s4 + $0x14] sm:$0xf]
    %v361 = vld [vmem:[%s4 + $0x18] sm:$0xf]
    %v362 = vld [vmem:[%s4 + $0x1c] sm:$0xf]
    %v363 = vld [vmem:[%s4 + $0x20] sm:$0xf]
    %v364 = vld [vmem:[%s4 + $0x24] sm:$0xf]
    %v365 = vld [vmem:[%s4 + $0x28] sm:$0xf]
    %v366 = vld [vmem:[%s4 + $0x2c] sm:$0xf]
    %v367 = vpack.c.bf16 %v354, %v353
    %v368 = vperm.slane %v32, 1
    %v373 = vunpack.c.l.b16 %v355
    %v374 = vunpack.c.l.b16 %v356
    %v375 = vunpack.c.l.b16 %v357
    %v376 = vunpack.c.l.b16 %v358
    %v377 = vpack.c.b16 %v374, %v373
    %v378 = vpack.c.b16 %v376, %v375
    %v382 = vsel %vm61, %v367, 0
    %384 = vmatpush.bf16.msra.mxu0 0
    %385 = vmatpush.bf16.msra.mxu0 0
    %386 = vmatpush.bf16.msra.mxu0 0
    %387 = vmatpush.bf16.msra.mxu0 0
    %388 = vmatpush.bf16.msra.mxu0 0
    %389 = vmatpush.bf16.msra.mxu0 0
    %390 = vmatpush.bf16.msra.mxu0 %v378
    %391 = vmatpush.bf16.msra.mxu0 %v377
    %392 = vmatmul.bf16.gmra.mxu0 %v382
    %v393 = vpop.f32.mrf.mxu0
    %v394 = vadd.f32 %v368, %v393
    %v395 = vpop.f32.mrf.mxu0
    %v396 = vadd.f32 %v368, %v395
    %397 = vdwg.mxu0
    %v398 = vmul.f32 %v394, 0.5
    %v399 = vmul.f32 %v396, 0.5
    %v400 = vmul.f32 %v394, 0.044715
    %v401 = vmul.f32 %v396, 0.044715
    %v402 = vmul.f32 %v400, %v394
    %v403 = vmul.f32 %v401, %v396
    %v404 = vmul.f32 %v402, %v394
    %v405 = vmul.f32 %v403, %v396
    %v406 = vadd.f32 %v394, %v404
    %v407 = vadd.f32 %v396, %v405
    %v408 = vmul.f32 %v406, 0.7978846
    %v409 = vmul.f32 %v407, 0.7978846
    %v410 = vtanh.pop %v408
    %v411 = vtanh.pop %v409
    %v412 = vadd.f32 %v410, 1.0
    %v413 = vadd.f32 %v411, 1.0
    %v414 = vmul.f32 %v398, %v412
    %v415 = vmul.f32 %v399, %v413
    %v416 = vpack.c.bf16 %v415, %v414
    %v417 = vperm.slane %v32, 0
    %v426 = vunpack.c.l.b16 %v359
    %v427 = vunpack.c.l.b16 %v360
    %v428 = vunpack.c.l.b16 %v361
    %v429 = vunpack.c.l.b16 %v362
    %v430 = vunpack.c.l.b16 %v363
    %v431 = vunpack.c.l.b16 %v364
    %v432 = vunpack.c.l.b16 %v365
    %v433 = vunpack.c.l.b16 %v366
    %v434 = vpack.c.b16 %v427, %v426
    %v435 = vpack.c.b16 %v429, %v428
    %v436 = vpack.c.b16 %v431, %v430
    %v437 = vpack.c.b16 %v433, %v432
    %v443 = vsel %vm201, %v416, 0
    %445 = vmatpush.bf16.msra.mxu0 0
    %446 = vmatpush.bf16.msra.mxu0 0
    %447 = vmatpush.bf16.msra.mxu0 0
    %448 = vmatpush.bf16.msra.mxu0 0
    %449 = vmatpush.bf16.msra.mxu0 %v437
    %450 = vmatpush.bf16.msra.mxu0 %v436
    %451 = vmatpush.bf16.msra.mxu0 %v435
    %452 = vmatpush.bf16.msra.mxu0 %v434
    %453 = vmatmul.bf16.gmra.mxu0 %v443
    %v454 = vpop.f32.mrf.mxu0
    %v455 = vadd.f32 %v417, %v454
    %v456 = vpop.f32.mrf.mxu0
    %v457 = vadd.f32 %v417, %v456
    %458 = vdwg.mxu0
    %v459 = vadd.f32 %v353, %v455
    %v460 = vadd.f32 %v354, %v457
    %v461 = vsel %vm61, %v459, 0.0
    %462 = vadd.xlane.f32.xlu0 %v461
    %v463 = vpop.xlane.xlu0 %462
    %v464 = vsel %vm61, %v460, 0.0
    %465 = vadd.xlane.f32.xlu0 %v464
    %v466 = vpop.xlane.xlu0 %465
    %v467 = vmul.f32 %v463, %v310
    %v468 = vmul.f32 %v466, %v310
    %v469 = vsub.f32 %v459, %v467
    %v470 = vsub.f32 %v460, %v468
    %v471 = vmul.f32 %v469, %v469
    %v472 = vmul.f32 %v470, %v470
    %v473 = vsel %vm61, %v471, 0.0
    %474 = vadd.xlane.f32.xlu0 %v473
    %v475 = vpop.xlane.xlu0 %474
    %v476 = vsel %vm61, %v472, 0.0
    %477 = vadd.xlane.f32.xlu0 %v476
    %v478 = vpop.xlane.xlu0 %477
    %v479 = vmul.f32 %v475, %v310
    %v480 = vmul.f32 %v478, %v310
    %v481 = vadd.f32 %v479, 1e-05
    %v482 = vadd.f32 %v480, 1e-05
    %v483 = vrsqrt.pop %v481
    %v484 = vmul.f32 %v483, %v481
    %v485 = vmul.f32 %v484, %v483
    %v486 = vmul.f32 0.5, %v485
    %v487 = vsub.f32 1.5, %v486
    %v488 = vmul.f32 %v483, %v487
    %vm489 = vweird.f32 %v481
    %vm490 = vweird.f32 %v483
    %vm491 = vmor %vm489, %vm490
    %v492 = vsel %vm491, %v483, %v488
    %v493 = vrsqrt.pop %v482
    %v494 = vmul.f32 %v493, %v482
    %v495 = vmul.f32 %v494, %v493
    %v496 = vmul.f32 0.5, %v495
    %v497 = vsub.f32 1.5, %v496
    %v498 = vmul.f32 %v493, %v497
    %vm499 = vweird.f32 %v482
    %vm500 = vweird.f32 %v493
    %vm501 = vmor %vm499, %vm500
    %v502 = vsel %vm501, %v493, %v498
    %v503 = vmul.f32 %v469, %v492
    %v504 = vmul.f32 %v470, %v502
    %v505 = vperm.slane %v31, 6
    %v506 = vmul.f32 %v503, %v505
    %v507 = vmul.f32 %v504, %v505
    %v508 = vperm.slane %v31, 7
    %v509 = vadd.f32 %v506, %v508
    %v510 = vadd.f32 %v507, %v508
    %511 = vst.msk [vmem:[#allocation2] sm:$0xff] %vm61, %v509
    %512 = vst.msk [vmem:[#allocation2 + $0x8] sm:$0xff] %vm61, %v510
    // Predicated region
    $region26: #{transformer_encoder_layer.1} parent=1 // pred_check
      _
    $region27: #{transformer_encoder_layer.1} parent=1 // pred_check_branch
      %514 = sbr.rel (0) target = $region29
    $region28: #{transformer_encoder_layer.1} parent=1 // pred_region
      %516 = vsyncadd [#allocation3], 0
      %s517 = sshll.u32 [#allocation2], 4
      %s518 = int_to_ptr.vmem [resolvable:$true] %s517
      %s519 = sshll.u32 %s6, 4
      %s520 = int_to_ptr.hbm [resolvable:$true] %s519
      %525 = dma.vmem_to_hbm [thread:$0]  %s518, 256, %s520, [#allocation3], 128, 128, 8
    $region29: #{transformer_encoder_layer.1} parent=1 // pred_fallthru
      _
    // Predicated region
    $region30: #{transformer_encoder_layer.1} parent=1 // pred_check
      _
    $region31: #{transformer_encoder_layer.1} parent=1 // pred_check_branch
      %527 = sbr.rel (0) target = $region33
    $region32: #{transformer_encoder_layer.1} parent=1 // pred_region
      %529 = dma.done [#allocation3], 256
    $region33: #{transformer_encoder_layer.1} parent=1 // pred_fallthru
      _
    %530 = vsyncpa [#allocation3], 1

</llo_original>
